<compile_context>
chip_gen: v6e
topology: v6e:2x2x1
jax: 0.10.0
libtpu: 0.0.40
codegen_flags: <defaults>
</compile_context>

<pallas_src>
import math

import jax
import jax.numpy as jnp
from jax.experimental import pallas as pl
from jax.experimental.pallas import tpu as pltpu


_DEFAULT_VMEM_BYTES = 64 * 1024 * 1024   # conservative fallback (v7x per-TC VMEM)
_HEADROOM_BYTES = 8 * 1024 * 1024        # Mosaic internal scratch / spill slabs
_EXTRA_SLACK_BYTES = 4 * 1024 * 1024     # margin when comparing working set vs budget
_I_CHUNK = 512                           # intermediate chunk width (resident path)


def _round_up(x, m):
    return (x + m - 1) // m * m


def _vmem_capacity_bytes():
    """Physical VMEM per TensorCore; falls back to the smallest (v7x) value."""
    try:
        info = pltpu.get_tpu_info()
        cap = getattr(info, "vmem_capacity_bytes", None)
        if cap:
            return int(cap)
    except Exception:
        pass
    return _DEFAULT_VMEM_BYTES


def _vmem_budget_bytes():
    cap = _vmem_capacity_bytes()
    # Never request all of physical VMEM (esp. v7x @ 64 MiB): ~85% or cap-8MiB.
    return max(16 * 1024 * 1024, min(int(cap * 0.85), cap - _HEADROOM_BYTES))


def _gelu_new(x):
    # GPT-2 / "gelu_new" activation (tanh approximation), matching ACT2FN["gelu_new"].
    # x + 0.044715*x^3 written as x*(1 + 0.044715*x*x) to save a VALU op.
    c = math.sqrt(2.0 / math.pi)
    return 0.5 * x * (1.0 + jnp.tanh(c * (x * (1.0 + 0.044715 * x * x))))


def _resident_spec(block_shape):
    """Full-resident block: constant index_map; single-buffered if supported."""
    nd = len(block_shape)
    idx = lambda i: (0,) * nd
    try:
        return pl.BlockSpec(block_shape, idx, pipeline_mode=pl.Buffered(1))
    except TypeError:
        # Older BlockSpec without pipeline_mode: fall back to default buffering.
        return pl.BlockSpec(block_shape, idx)


def _make_resident_kernel(i_chunk, n_chunks):
    def kernel(x_ref, w1_ref, b1_ref, w2_ref, b2_ref, o_ref):
        x = x_ref[...]
        acc = jnp.zeros((x.shape[0], o_ref.shape[1]), jnp.float32)
        # Static unrolled loop over intermediate chunks: keeps the live f32
        # gelu slab at (tm, i_chunk) and lets EUP tanh overlap MXU pushes.
        for c in range(n_chunks):
            lo, hi = c * i_chunk, (c + 1) * i_chunk
            h = jnp.dot(x, w1_ref[:, lo:hi], preferred_element_type=jnp.float32)
            a = _gelu_new(h + b1_ref[:, lo:hi])
            acc = acc + jnp.dot(a.astype(w2_ref.dtype), w2_ref[lo:hi, :],
                                preferred_element_type=jnp.float32)
        o_ref[...] = (acc + b2_ref[...]).astype(o_ref.dtype)

    return kernel


def _mlp_kernel_tiled(x_ref, w1_ref, b1_ref, w2_ref, b2_ref, o_ref, acc_ref):
    # Tile the intermediate dimension (reduction axis j); accumulate partial
    # c_proj contributions in an f32 VMEM accumulator.
    j = pl.program_id(1)

    @pl.when(j == 0)
    def _():
        acc_ref[...] = jnp.zeros_like(acc_ref)

    h = jnp.dot(x_ref[...], w1_ref[...], preferred_element_type=jnp.float32)
    a = _gelu_new(h + b1_ref[...])
    acc_ref[...] += jnp.dot(a.astype(w2_ref.dtype), w2_ref[...],
                            preferred_element_type=jnp.float32)

    # Unconditional store: the output block index is constant across j, so the
    # HBM writeback only happens when the row tile changes (after the last j).
    o_ref[...] = (acc_ref[...] + b2_ref[...]).astype(o_ref.dtype)


def stackt5_mlp(hidden_states, w_fc, b_fc, w_proj, b_proj, *, tm=None, ti=512):
    """hidden_states: [B, S, H]; w_fc: [H, I]; b_fc: [I]; w_proj: [I, H]; b_proj: [H]."""
    B, S, H = hidden_states.shape
    I = w_fc.shape[1]
    M = B * S
    x2d = hidden_states.reshape(M, H)
    out_dtype = hidden_states.dtype

    x_bytes = x2d.dtype.itemsize
    o_bytes = jnp.dtype(out_dtype).itemsize
    w_elem_bytes = w_fc.dtype.itemsize

    b1 = b_fc.reshape(1, I)
    b2 = b_proj.reshape(1, H)

    vmem_budget = _vmem_budget_bytes()
    weight_bytes = (w_fc.size + w_proj.size) * w_elem_bytes
    bias_bytes = (b1.size + b2.size) * w_elem_bytes

    flops = 4 * M * H * I             # two matmuls
    transcendentals = M * I           # one tanh per intermediate element

    # ---------------- Resident-weight fast path ----------------
    tm_res = tm if tm is not None else 256
    if M <= tm_res:
        tm_res = max(8, _round_up(M, 8))

    if I > _I_CHUNK and I % _I_CHUNK == 0:
        i_chunk = _I_CHUNK
    else:
        i_chunk = I
    n_chunks = I // i_chunk

    resident_ws = (
        weight_bytes + bias_bytes            # weights/biases, single-buffered
        + 2 * tm_res * H * x_bytes           # x rows (double-buffered)
        + 2 * tm_res * H * o_bytes           # output rows (double-buffered)
        + tm_res * i_chunk * 4               # f32 gelu slab
        + tm_res * H * 4                     # f32 accumulator
    )
    use_resident = resident_ws + _EXTRA_SLACK_BYTES <= vmem_budget

    if use_resident:
        M_pad = _round_up(M, tm_res)
        xp = jnp.pad(x2d, ((0, M_pad - M), (0, 0))) if M_pad != M else x2d

        cost = pl.CostEstimate(
            flops=flops,
            transcendentals=transcendentals,
            bytes_accessed=M * H * (x_bytes + o_bytes) + weight_bytes + bias_bytes,
        )
        out2d = pl.pallas_call(
            _make_resident_kernel(i_chunk, n_chunks),
            out_shape=jax.ShapeDtypeStruct((M_pad, H), out_dtype),
            grid_spec=pltpu.PrefetchScalarGridSpec(
                num_scalar_prefetch=0,
                grid=(M_pad // tm_res,),
                in_specs=[
                    pl.BlockSpec((tm_res, H), lambda i: (i, 0)),  # x rows
                    _resident_spec((H, I)),                       # W1 (resident, 1-buf)
                    _resident_spec((1, I)),                       # b1
                    _resident_spec((I, H)),                       # W2 (resident, 1-buf)
                    _resident_spec((1, H)),                       # b2
                ],
                out_specs=pl.BlockSpec((tm_res, H), lambda i: (i, 0)),
            ),
            compiler_params=pltpu.CompilerParams(
                # "parallel" lets the row-tile axis shard across TCs (v7x megacore).
                dimension_semantics=("parallel",),
                vmem_limit_bytes=vmem_budget),
            cost_estimate=cost,
        )(xp, w_fc, b1, w_proj, b2)

        if M_pad != M:
            out2d = out2d[:M]
        return out2d.reshape(B, S, H)

    # ---------------- Tiled fallback (weights too big for VMEM) ----------------
    def tiled_ws(tm_, ti_):
        return (2 * tm_ * H * x_bytes          # x rows (double-buffered)
                + 2 * H * ti_ * w_elem_bytes   # W1 column chunk
                + 2 * ti_ * w_elem_bytes       # b1 chunk
                + 2 * ti_ * H * w_elem_bytes   # W2 row chunk
                + 2 * H * w_elem_bytes         # b2
                + 2 * tm_ * H * o_bytes        # output rows
                + tm_ * H * 4                  # f32 accumulator scratch
                + tm_ * ti_ * 4)               # f32 gelu slab

    if tm is not None:
        tm_t = tm
    else:
        tm_t = 128
        for cand in (1024, 512, 256):          # largest first: weight traffic ~ M/tm
            if tiled_ws(cand, ti) + _EXTRA_SLACK_BYTES <= vmem_budget:
                tm_t = cand
                break
    if M <= tm_t:
        tm_t = max(8, _round_up(M, 8))

    M_pad = _round_up(M, tm_t)
    xp = jnp.pad(x2d, ((0, M_pad - M), (0, 0))) if M_pad != M else x2d

    # Pad the intermediate dim to the tile with zeros: gelu_new(0) == 0 and the
    # padded W2 rows are zero, so padded columns contribute nothing.
    I_pad = _round_up(I, ti)
    if I_pad != I:
        w_fc_p = jnp.pad(w_fc, ((0, 0), (0, I_pad - I)))
        w_proj_p = jnp.pad(w_proj, ((0, I_pad - I), (0, 0)))
        b1p = jnp.pad(b1, ((0, 0), (0, I_pad - I)))
    else:
        w_fc_p, w_proj_p, b1p = w_fc, w_proj, b1

    n_row_tiles = M_pad // tm_t
    cost = pl.CostEstimate(
        flops=flops,
        transcendentals=transcendentals,
        bytes_accessed=(M * H * (x_bytes + o_bytes)
                        + n_row_tiles * (weight_bytes + bias_bytes)),
    )
    out2d = pl.pallas_call(
        _mlp_kernel_tiled,
        out_shape=jax.ShapeDtypeStruct((M_pad, H), out_dtype),
        grid_spec=pltpu.PrefetchScalarGridSpec(
            num_scalar_prefetch=0,
            grid=(M_pad // tm_t, I_pad // ti),
            in_specs=[
                pl.BlockSpec((tm_t, H), lambda i, j: (i, 0)),   # x rows
                pl.BlockSpec((H, ti), lambda i, j: (0, j)),     # W1 column chunk
                pl.BlockSpec((1, ti), lambda i, j: (0, j)),     # b1 chunk
                pl.BlockSpec((ti, H), lambda i, j: (j, 0)),     # W2 row chunk
                pl.BlockSpec((1, H), lambda i, j: (0, 0)),      # b2
            ],
            out_specs=pl.BlockSpec((tm_t, H), lambda i, j: (i, 0)),
            scratch_shapes=[pltpu.VMEM((tm_t, H), jnp.float32)],
        ),
        compiler_params=pltpu.CompilerParams(
            dimension_semantics=("parallel", "arbitrary"),
            vmem_limit_bytes=vmem_budget),
        cost_estimate=cost,
    )(xp, w_fc_p, b1p, w_proj_p, b2)

    if M_pad != M:
        out2d = out2d[:M]
    return out2d.reshape(B, S, H)


def _reference(hidden_states, w_fc, b_fc, w_proj, b_proj):
    h = hidden_states @ w_fc + b_fc
    h = _gelu_new(h)
    h = h @ w_proj + b_proj
    return h


if __name__ == "__main__":
    # Small shapes consistent with the module: hidden_size=32, intermediate=256.
    B, S, H, I = 2, 8, 32, 256
    key = jax.random.PRNGKey(0)
    kx, k1, k2, k3, k4 = jax.random.split(key, 5)

    x = jax.random.normal(kx, (B, S, H), dtype=jnp.float32)
    # nn.Linear(H, I) / nn.Linear(I, H) parameters, stored as [in, out].
    w_fc = jax.random.normal(k1, (H, I), dtype=jnp.float32) * (1.0 / math.sqrt(H))
    b_fc = jax.random.normal(k2, (I,), dtype=jnp.float32) * 0.02
    w_proj = jax.random.normal(k3, (I, H), dtype=jnp.float32) * (1.0 / math.sqrt(I))
    b_proj = jax.random.normal(k4, (H,), dtype=jnp.float32) * 0.02

    # TODO(synk): dropout (resid_pdrop) is identity in eval mode; not applied here.
    out = stackt5_mlp(x, w_fc, b_fc, w_proj, b_proj)
    out = jax.block_until_ready(out)

    ref = _reference(x, w_fc, b_fc, w_proj, b_proj)
    assert out.shape == (B, S, H)
    assert jnp.allclose(out, ref, atol=1e-4, rtol=1e-4), float(jnp.max(jnp.abs(out - ref)))
    print("KERNEL_OK")
</pallas_src>

<mosaic_0001>
module attributes {stable_mosaic.version = 11 : i64} {
  func.func @kernel(%arg0: i32, %arg1: memref<16x32xf32, #tpu.memory_space<vmem>>, %arg2: memref<32x256xf32, #tpu.memory_space<vmem>>, %arg3: memref<1x256xf32, #tpu.memory_space<vmem>>, %arg4: memref<256x32xf32, #tpu.memory_space<vmem>>, %arg5: memref<1x32xf32, #tpu.memory_space<vmem>>, %arg6: memref<16x32xf32, #tpu.memory_space<vmem>>) attributes {dimension_semantics = [#tpu.dimension_semantics<parallel>], iteration_bounds = array<i64: 1>, scalar_prefetch = 0 : i64, scratch_operands = 0 : i64, tpu.core_type = #tpu.core_type<tc>, window_params = [{transform_indices = @transform_0, window_bounds = array<i64: 16, 32>}, {pipeline_mode = #tpu.pipeline_mode<synchronous>, transform_indices = @transform_1, window_bounds = array<i64: 32, 256>}, {pipeline_mode = #tpu.pipeline_mode<synchronous>, transform_indices = @transform_2, window_bounds = array<i64: 1, 256>}, {pipeline_mode = #tpu.pipeline_mode<synchronous>, transform_indices = @transform_3, window_bounds = array<i64: 256, 32>}, {pipeline_mode = #tpu.pipeline_mode<synchronous>, transform_indices = @transform_4, window_bounds = array<i64: 1, 32>}, {transform_indices = @transform_5, window_bounds = array<i64: 16, 32>}]} {
    %c0 = arith.constant 0 : index
    %c0_0 = arith.constant 0 : index
    %0 = vector.load %arg1[%c0, %c0_0] : memref<16x32xf32, #tpu.memory_space<vmem>>, vector<16x32xf32>
    %cst = arith.constant 0.000000e+00 : f32
    %1 = vector.broadcast %cst : f32 to vector<16x32xf32>
    %c0_1 = arith.constant 0 : index
    %c0_2 = arith.constant 0 : index
    %2 = vector.load %arg2[%c0_1, %c0_2] : memref<32x256xf32, #tpu.memory_space<vmem>>, vector<32x256xf32>
    %cst_3 = arith.constant dense<0.000000e+00> : vector<16x256xf32>
    %3 = tpu.matmul %0, %2, %cst_3 {dimension_numbers = #tpu.dot_dimension_numbers<[1], [0], [0], [1], [0, 0, 1, 1], [], []>} : vector<16x32xf32>, vector<32x256xf32>, vector<16x256xf32> -> vector<16x256xf32>
    %c0_4 = arith.constant 0 : index
    %c0_5 = arith.constant 0 : index
    %4 = vector.load %arg3[%c0_4, %c0_5] : memref<1x256xf32, #tpu.memory_space<vmem>>, vector<1x256xf32>
    %5 = vector.broadcast %4 : vector<1x256xf32> to vector<16x256xf32>
    %6 = arith.addf %3, %5 : vector<16x256xf32>
    %cst_6 = arith.constant 5.000000e-01 : f32
    %7 = vector.broadcast %cst_6 : f32 to vector<16x256xf32>
    %8 = arith.mulf %7, %6 : vector<16x256xf32>
    %cst_7 = arith.constant 4.471500e-02 : f32
    %9 = vector.broadcast %cst_7 : f32 to vector<16x256xf32>
    %10 = arith.mulf %9, %6 : vector<16x256xf32>
    %11 = arith.mulf %10, %6 : vector<16x256xf32>
    %cst_8 = arith.constant 1.000000e+00 : f32
    %12 = vector.broadcast %cst_8 : f32 to vector<16x256xf32>
    %13 = arith.addf %12, %11 : vector<16x256xf32>
    %14 = arith.mulf %6, %13 : vector<16x256xf32>
    %cst_9 = arith.constant 0.797884583 : f32
    %15 = vector.broadcast %cst_9 : f32 to vector<16x256xf32>
    %16 = arith.mulf %15, %14 : vector<16x256xf32>
    %17 = math.tanh %16 : vector<16x256xf32>
    %cst_10 = arith.constant 1.000000e+00 : f32
    %18 = vector.broadcast %cst_10 : f32 to vector<16x256xf32>
    %19 = arith.addf %18, %17 : vector<16x256xf32>
    %20 = arith.mulf %8, %19 : vector<16x256xf32>
    %c0_11 = arith.constant 0 : index
    %c0_12 = arith.constant 0 : index
    %21 = vector.load %arg4[%c0_11, %c0_12] : memref<256x32xf32, #tpu.memory_space<vmem>>, vector<256x32xf32>
    %cst_13 = arith.constant dense<0.000000e+00> : vector<16x32xf32>
    %22 = tpu.matmul %20, %21, %cst_13 {dimension_numbers = #tpu.dot_dimension_numbers<[1], [0], [0], [1], [0, 0, 1, 1], [], []>} : vector<16x256xf32>, vector<256x32xf32>, vector<16x32xf32> -> vector<16x32xf32>
    %23 = arith.addf %1, %22 : vector<16x32xf32>
    %c0_14 = arith.constant 0 : index
    %c0_15 = arith.constant 0 : index
    %24 = vector.load %arg5[%c0_14, %c0_15] : memref<1x32xf32, #tpu.memory_space<vmem>>, vector<1x32xf32>
    %25 = vector.broadcast %24 : vector<1x32xf32> to vector<16x32xf32>
    %26 = arith.addf %23, %25 : vector<16x32xf32>
    %c0_16 = arith.constant 0 : index
    %c0_17 = arith.constant 0 : index
    %27 = vector.load %arg6[%c0_16, %c0_17] : memref<16x32xf32, #tpu.memory_space<vmem>>, vector<16x32xf32>
    tpu.vector_store %arg6[%c0_16, %c0_17], %26 {strides = array<i32>} : memref<16x32xf32, #tpu.memory_space<vmem>>, vector<16x32xf32>,
    return
  }
  func.func @transform_0(%arg0: i32) -> (i32, i32) {
    %c0_i32 = arith.constant 0 : i32
    %c0_i32_0 = arith.constant 0 : i32
    return %arg0, %c0_i32 : i32, i32
  }
  func.func @transform_1(%arg0: i32) -> (i32, i32) {
    %c0_i32 = arith.constant 0 : i32
    %c0_i32_0 = arith.constant 0 : i32
    %c0_i32_1 = arith.constant 0 : i32
    return %c0_i32, %c0_i32_0 : i32, i32
  }
  func.func @transform_2(%arg0: i32) -> (i32, i32) {
    %c0_i32 = arith.constant 0 : i32
    %c0_i32_0 = arith.constant 0 : i32
    %c0_i32_1 = arith.constant 0 : i32
    return %c0_i32, %c0_i32_0 : i32, i32
  }
  func.func @transform_3(%arg0: i32) -> (i32, i32) {
    %c0_i32 = arith.constant 0 : i32
    %c0_i32_0 = arith.constant 0 : i32
    %c0_i32_1 = arith.constant 0 : i32
    return %c0_i32, %c0_i32_0 : i32, i32
  }
  func.func @transform_4(%arg0: i32) -> (i32, i32) {
    %c0_i32 = arith.constant 0 : i32
    %c0_i32_0 = arith.constant 0 : i32
    %c0_i32_1 = arith.constant 0 : i32
    return %c0_i32, %c0_i32_0 : i32, i32
  }
  func.func @transform_5(%arg0: i32) -> (i32, i32) {
    %c0_i32 = arith.constant 0 : i32
    %c0_i32_0 = arith.constant 0 : i32
    return %arg0, %c0_i32 : i32, i32
  }
}

</mosaic_0001>

<llo_original>
// kernel: tpu_custom_call.1
$region0: #{tpu_custom_call.1}
  #allocation0 [shape = 'u32[]', space=smem, size = 0x4, offset = 0x4, fixed_abs, tag = 'smem constant byte address 0x4 - core index']
  #allocation1 [shape = 'u32[144,128]{1,0:T(1,128)}', space=vmem, size = 0x12000, scoped, tag = 'internal scratch']
  %s0 = inlined_call_operand.vmem [shape: f32[16,32], index: 0, kind: input, shape index: {}]
  %s1 = inlined_call_operand.vmem [shape: f32[32,256], index: 1, kind: input, shape index: {}]
  %s2 = inlined_call_operand.vmem [shape: f32[1,256], index: 2, kind: input, shape index: {}]
  %s3 = inlined_call_operand.vmem [shape: f32[256,32], index: 3, kind: input, shape index: {}]
  %s4 = inlined_call_operand.vmem [shape: f32[1,32], index: 4, kind: input, shape index: {}]
  %s5 = inlined_call_operand.hbm [shape: f32[16,32], index: 5, kind: output, shape index: {}]
  %s6 = sld [smem:[#allocation0]]
  $region30: #{tpu_custom_call.1} parent=0
    _
  %s8 = ssub.s32 1, %s6
  %s9 = scalar_select 0, %s8, %s6
  $region1: #{tpu_custom_call.1} parent=0
    #allocation2 [shape = 'u8[8192]{0}', space=vmem, size = 0x2000, scoped, tag = 'output window, operand 0, single buffered']
    #allocation3 [shape = 's32[1]{0}', space=sflag, size = 0x4, scoped, tag = 'scoped memory for tpu_custom_call.1']
    %10 = vsyncpa [#allocation3], 0
    // Predicated region
    $region2: #{tpu_custom_call.1} parent=1 // pred_check
      _
    $region3: #{tpu_custom_call.1} parent=1 // pred_check_branch
      %12 = sbr.rel (0) target = $region5
    $region4: #{tpu_custom_call.1} parent=1 // pred_region
      _
    $region5: #{tpu_custom_call.1} parent=1 // pred_fallthru
      _
    // Predicated region
    $region6: #{tpu_custom_call.1} parent=1 // pred_check
      _
    $region7: #{tpu_custom_call.1} parent=1 // pred_check_branch
      %14 = sbr.rel (0) target = $region9
    $region8: #{tpu_custom_call.1} parent=1 // pred_region
      _
    $region9: #{tpu_custom_call.1} parent=1 // pred_fallthru
      _
    // Predicated region
    $region10: #{tpu_custom_call.1} parent=1 // pred_check
      _
    $region11: #{tpu_custom_call.1} parent=1 // pred_check_branch
      %16 = sbr.rel (0) target = $region13
    $region12: #{tpu_custom_call.1} parent=1 // pred_region
      _
    $region13: #{tpu_custom_call.1} parent=1 // pred_fallthru
      _
    // Predicated region
    $region14: #{tpu_custom_call.1} parent=1 // pred_check
      _
    $region15: #{tpu_custom_call.1} parent=1 // pred_check_branch
      %18 = sbr.rel (0) target = $region17
    $region16: #{tpu_custom_call.1} parent=1 // pred_region
      _
    $region17: #{tpu_custom_call.1} parent=1 // pred_fallthru
      _
    // Predicated region
    $region18: #{tpu_custom_call.1} parent=1 // pred_check
      _
    $region19: #{tpu_custom_call.1} parent=1 // pred_check_branch
      %20 = sbr.rel (0) target = $region21
    $region20: #{tpu_custom_call.1} parent=1 // pred_region
      _
    $region21: #{tpu_custom_call.1} parent=1 // pred_fallthru
      _
    %v21 = vld [vmem:[%s0] sm:$0xff]
    %v22 = vld [vmem:[%s0 + $0x8] sm:$0xff]
    %v23 = vld [vmem:[%s1] sm:$0xff]
    %v24 = vld [vmem:[%s1 + $0x8] sm:$0xff]
    %v25 = vld [vmem:[%s1 + $0x10] sm:$0xff]
    %v26 = vld [vmem:[%s1 + $0x18] sm:$0xff]
    %v27 = vld [vmem:[%s1 + $0x20] sm:$0xff]
    %v28 = vld [vmem:[%s1 + $0x28] sm:$0xff]
    %v29 = vld [vmem:[%s1 + $0x30] sm:$0xff]
    %v30 = vld [vmem:[%s1 + $0x38] sm:$0xff]
    %v31 = vld [vmem:[%s2] sm:$0x3]
    %v33 = vlaneseq
    %v34 = vshrl.u32 %v33, 7
    %v35 = vsub.s32 0, %v34
    %v36 = vrot.slane %v31, %v35
    %v37 = vlaneseq
    %v38 = vshrl.u32 %v37, 7
    %v39 = vsub.s32 1, %v38
    %v40 = vrot.slane %v31, %v39
    %vm43 = vcmask 261120
    %v45 = vsel %vm43, %v21, 0
    %v48 = vsel %vm43, %v22, 0
    %50 = vmatprep.subr.mxu0 0.0
    %51 = vmatpush1.msra.mxu0 0.0
    %52 = vmatprep.subr.mxu0 0.0
    %53 = vmatpush1.msra.mxu0 0.0
    %54 = vmatprep.subr.mxu0 0.0
    %55 = vmatpush1.msra.mxu0 0.0
    %56 = vmatprep.subr.mxu0 0.0
    %57 = vmatpush1.msra.mxu0 0.0
    %58 = vmatprep.subr.mxu0 0.0
    %59 = vmatpush1.msra.mxu0 0.0
    %60 = vmatprep.subr.mxu0 0.0
    %61 = vmatpush1.msra.mxu0 0.0
    %62 = vmatprep.subr.mxu0 0.0
    %63 = vmatpush1.msra.mxu0 0.0
    %64 = vmatprep.subr.mxu0 0.0
    %65 = vmatpush1.msra.mxu0 0.0
    %66 = vmatprep.subr.mxu0 0.0
    %67 = vmatpush1.msra.mxu0 0.0
    %68 = vmatprep.subr.mxu0 0.0
    %69 = vmatpush1.msra.mxu0 0.0
    %70 = vmatprep.subr.mxu0 0.0
    %71 = vmatpush1.msra.mxu0 0.0
    %72 = vmatprep.subr.mxu0 0.0
    %73 = vmatpush1.msra.mxu0 0.0
    %74 = vmatprep.subr.mxu0 %v30
    %75 = vmatpush1.msra.mxu0 %v29
    %76 = vmatprep.subr.mxu0 %v28
    %77 = vmatpush1.msra.mxu0 %v27
    %78 = vmatprep.subr.mxu0 %v26
    %79 = vmatpush1.msra.mxu0 %v25
    %80 = vmatprep.subr.mxu0 %v24
    %81 = vmatpush1.msra.mxu0 %v23
    %82 = vmatprep.subr.mxu0 0.0
    %83 = vmatpush2.msra.mxu0 0.0
    %84 = vmatprep.subr.mxu0 0.0
    %85 = vmatpush2.msra.mxu0 0.0
    %86 = vmatprep.subr.mxu0 0.0
    %87 = vmatpush2.msra.mxu0 0.0
    %88 = vmatprep.subr.mxu0 0.0
    %89 = vmatpush2.msra.mxu0 0.0
    %90 = vmatprep.subr.mxu0 0.0
    %91 = vmatpush2.msra.mxu0 0.0
    %92 = vmatprep.subr.mxu0 0.0
    %93 = vmatpush2.msra.mxu0 0.0
    %94 = vmatprep.subr.mxu0 0.0
    %95 = vmatpush2.msra.mxu0 0.0
    %96 = vmatprep.subr.mxu0 0.0
    %97 = vmatpush2.msra.mxu0 0.0
    %98 = vmatprep.subr.mxu0 0.0
    %99 = vmatpush2.msra.mxu0 0.0
    %100 = vmatprep.subr.mxu0 0.0
    %101 = vmatpush2.msra.mxu0 0.0
    %102 = vmatprep.subr.mxu0 0.0
    %103 = vmatpush2.msra.mxu0 0.0
    %104 = vmatprep.subr.mxu0 0.0
    %105 = vmatpush2.msra.mxu0 0.0
    %106 = vmatprep.subr.mxu0 0.0
    %107 = vmatpush2.msra.mxu0 0.0
    %108 = vmatprep.subr.mxu0 0.0
    %109 = vmatpush2.msra.mxu0 0.0
    %110 = vmatprep.subr.mxu0 0.0
    %111 = vmatpush2.msra.mxu0 0.0
    %112 = vmatprep.subr.mxu0 0.0
    %113 = vmatpush2.msra.mxu0 0.0
    %114 = vmatprep.mubr.f32.mxu0 0.0
    %115 = vmatmul.mubr.f32.gmra.mxu0 %v45
    %v116 = vpop.f32.mrf.mxu0
    %v117 = vadd.f32 %v36, %v116
    %v118 = vpop.f32.mrf.mxu0
    %v119 = vadd.f32 %v40, %v118
    %120 = vmatprep.mubr.f32.mxu0 0.0
    %121 = vmatmul.mubr.f32.gmra.mxu0 %v48
    %v122 = vpop.f32.mrf.mxu0
    %v123 = vadd.f32 %v36, %v122
    %v124 = vpop.f32.mrf.mxu0
    %v125 = vadd.f32 %v40, %v124
    %126 = vdwg.mxu0
    %v127 = vmul.f32 %v117, 0.5
    %v128 = vmul.f32 %v119, 0.5
    %v129 = vmul.f32 %v123, 0.5
    %v130 = vmul.f32 %v125, 0.5
    %v131 = vmul.f32 %v117, 0.044715
    %v132 = vmul.f32 %v119, 0.044715
    %v133 = vmul.f32 %v123, 0.044715
    %v134 = vmul.f32 %v125, 0.044715
    %v135 = vmul.f32 %v131, %v117
    %v136 = vmul.f32 %v132, %v119
    %v137 = vmul.f32 %v133, %v123
    %v138 = vmul.f32 %v134, %v125
    %v139 = vadd.f32 %v135, 1.0
    %v140 = vadd.f32 %v136, 1.0
    %v141 = vadd.f32 %v137, 1.0
    %v142 = vadd.f32 %v138, 1.0
    %v143 = vmul.f32 %v117, %v139
    %v144 = vmul.f32 %v119, %v140
    %v145 = vmul.f32 %v123, %v141
    %v146 = vmul.f32 %v125, %v142
    %v147 = vmul.f32 %v143, 0.7978846
    %v148 = vmul.f32 %v144, 0.7978846
    %v149 = vmul.f32 %v145, 0.7978846
    %v150 = vmul.f32 %v146, 0.7978846
    %v151 = vtanh.pop %v147
    %v152 = vtanh.pop %v148
    %v153 = vtanh.pop %v149
    %v154 = vtanh.pop %v150
    %v155 = vadd.f32 %v151, 1.0
    %v156 = vadd.f32 %v152, 1.0
    %v157 = vadd.f32 %v153, 1.0
    %v158 = vadd.f32 %v154, 1.0
    %v159 = vmul.f32 %v127, %v155
    %v160 = vmul.f32 %v128, %v156
    %v161 = vmul.f32 %v129, %v157
    %v162 = vmul.f32 %v130, %v158
    %v163 = vld [vmem:[%s3] sm:$0xff]
    %v164 = vld [vmem:[%s3 + $0x8] sm:$0xff]
    %v165 = vld [vmem:[%s3 + $0x10] sm:$0xff]
    %v166 = vld [vmem:[%s3 + $0x18] sm:$0xff]
    %v167 = vld [vmem:[%s3 + $0x20] sm:$0xff]
    %v168 = vld [vmem:[%s3 + $0x28] sm:$0xff]
    %v169 = vld [vmem:[%s3 + $0x30] sm:$0xff]
    %v170 = vld [vmem:[%s3 + $0x38] sm:$0xff]
    %v171 = vld [vmem:[%s3 + $0x40] sm:$0xff]
    %v172 = vld [vmem:[%s3 + $0x48] sm:$0xff]
    %v173 = vld [vmem:[%s3 + $0x50] sm:$0xff]
    %v174 = vld [vmem:[%s3 + $0x58] sm:$0xff]
    %v175 = vld [vmem:[%s3 + $0x60] sm:$0xff]
    %v176 = vld [vmem:[%s3 + $0x68] sm:$0xff]
    %v177 = vld [vmem:[%s3 + $0x70] sm:$0xff]
    %v178 = vld [vmem:[%s3 + $0x78] sm:$0xff]
    %v179 = vld [vmem:[%s3 + $0x80] sm:$0xff]
    %v180 = vld [vmem:[%s3 + $0x88] sm:$0xff]
    %v181 = vld [vmem:[%s3 + $0x90] sm:$0xff]
    %v182 = vld [vmem:[%s3 + $0x98] sm:$0xff]
    %v183 = vld [vmem:[%s3 + $0xa0] sm:$0xff]
    %v184 = vld [vmem:[%s3 + $0xa8] sm:$0xff]
    %v185 = vld [vmem:[%s3 + $0xb0] sm:$0xff]
    %v186 = vld [vmem:[%s3 + $0xb8] sm:$0xff]
    %v187 = vld [vmem:[%s3 + $0xc0] sm:$0xff]
    %v188 = vld [vmem:[%s3 + $0xc8] sm:$0xff]
    %v189 = vld [vmem:[%s3 + $0xd0] sm:$0xff]
    %v190 = vld [vmem:[%s3 + $0xd8] sm:$0xff]
    %v191 = vld [vmem:[%s3 + $0xe0] sm:$0xff]
    %v192 = vld [vmem:[%s3 + $0xe8] sm:$0xff]
    %v193 = vld [vmem:[%s3 + $0xf0] sm:$0xff]
    %v194 = vld [vmem:[%s3 + $0xf8] sm:$0xff]
    %v195 = vld [vmem:[%s4] sm:$0x1]
    %v197 = vlaneseq
    %v198 = vshrl.u32 %v197, 7
    %v199 = vsub.s32 0, %v198
    %v200 = vrot.slane %v195, %v199
    %202 = vmatprep.subr.mxu0 0.0
    %203 = vmatpush1.msra.mxu0 %v178
    %204 = vmatprep.subr.mxu0 0.0
    %205 = vmatpush1.msra.mxu0 %v177
    %206 = vmatprep.subr.mxu0 0.0
    %207 = vmatpush1.msra.mxu0 %v176
    %208 = vmatprep.subr.mxu0 0.0
    %209 = vmatpush1.msra.mxu0 %v175
    %210 = vmatprep.subr.mxu0 0.0
    %211 = vmatpush1.msra.mxu0 %v174
    %212 = vmatprep.subr.mxu0 0.0
    %213 = vmatpush1.msra.mxu0 %v173
    %214 = vmatprep.subr.mxu0 0.0
    %215 = vmatpush1.msra.mxu0 %v172
    %216 = vmatprep.subr.mxu0 0.0
    %217 = vmatpush1.msra.mxu0 %v171
    %218 = vmatprep.subr.mxu0 0.0
    %219 = vmatpush1.msra.mxu0 %v170
    %220 = vmatprep.subr.mxu0 0.0
    %221 = vmatpush1.msra.mxu0 %v169
    %222 = vmatprep.subr.mxu0 0.0
    %223 = vmatpush1.msra.mxu0 %v168
    %224 = vmatprep.subr.mxu0 0.0
    %225 = vmatpush1.msra.mxu0 %v167
    %226 = vmatprep.subr.mxu0 0.0
    %227 = vmatpush1.msra.mxu0 %v166
    %228 = vmatprep.subr.mxu0 0.0
    %229 = vmatpush1.msra.mxu0 %v165
    %230 = vmatprep.subr.mxu0 0.0
    %231 = vmatpush1.msra.mxu0 %v164
    %232 = vmatprep.subr.mxu0 0.0
    %233 = vmatpush1.msra.mxu0 %v163
    %234 = vmatprep.subr.mxu0 0.0
    %235 = vmatpush2.msra.mxu0 %v194
    %236 = vmatprep.subr.mxu0 0.0
    %237 = vmatpush2.msra.mxu0 %v193
    %238 = vmatprep.subr.mxu0 0.0
    %239 = vmatpush2.msra.mxu0 %v192
    %240 = vmatprep.subr.mxu0 0.0
    %241 = vmatpush2.msra.mxu0 %v191
    %242 = vmatprep.subr.mxu0 0.0
    %243 = vmatpush2.msra.mxu0 %v190
    %244 = vmatprep.subr.mxu0 0.0
    %245 = vmatpush2.msra.mxu0 %v189
    %246 = vmatprep.subr.mxu0 0.0
    %247 = vmatpush2.msra.mxu0 %v188
    %248 = vmatprep.subr.mxu0 0.0
    %249 = vmatpush2.msra.mxu0 %v187
    %250 = vmatprep.subr.mxu0 0.0
    %251 = vmatpush2.msra.mxu0 %v186
    %252 = vmatprep.subr.mxu0 0.0
    %253 = vmatpush2.msra.mxu0 %v185
    %254 = vmatprep.subr.mxu0 0.0
    %255 = vmatpush2.msra.mxu0 %v184
    %256 = vmatprep.subr.mxu0 0.0
    %257 = vmatpush2.msra.mxu0 %v183
    %258 = vmatprep.subr.mxu0 0.0
    %259 = vmatpush2.msra.mxu0 %v182
    %260 = vmatprep.subr.mxu0 0.0
    %261 = vmatpush2.msra.mxu0 %v181
    %262 = vmatprep.subr.mxu0 0.0
    %263 = vmatpush2.msra.mxu0 %v180
    %264 = vmatprep.subr.mxu0 0.0
    %265 = vmatpush2.msra.mxu0 %v179
    %266 = vmatprep.mubr.f32.mxu0 %v160
    %267 = vmatmul.mubr.f32.gmra.mxu0 %v159
    %v268 = vpop.f32.mrf.mxu0
    %v269 = vadd.f32 %v200, %v268
    %v270 = vpop.f32.mrf.mxu0
    %271 = vmatprep.mubr.f32.mxu0 %v162
    %272 = vmatmul.mubr.f32.gmra.mxu0 %v161
    %v273 = vpop.f32.mrf.mxu0
    %v274 = vadd.f32 %v200, %v273
    %v275 = vpop.f32.mrf.mxu0
    %276 = vdwg.mxu0
    %277 = vst.msk [vmem:[#allocation2] sm:$0xff] %vm43, %v269
    %278 = vst.msk [vmem:[#allocation2 + $0x8] sm:$0xff] %vm43, %v274
    // Predicated region
    $region22: #{tpu_custom_call.1} parent=1 // pred_check
      _
    $region23: #{tpu_custom_call.1} parent=1 // pred_check_branch
      %280 = sbr.rel (0) target = $region25
    $region24: #{tpu_custom_call.1} parent=1 // pred_region
      %s282 = ssub.s32 256, 256
      %283 = vsyncadd [#allocation3], %s282
      %s284 = sshll.u32 [#allocation2], 4
      %s285 = int_to_ptr.vmem [resolvable:$true] %s284
      %290 = dma.vmem_to_hbm [thread:$0]  %s285, 256, %s5, [#allocation3], 128, 128, 8
    $region25: #{tpu_custom_call.1} parent=1 // pred_fallthru
      _
    // Predicated region
    $region26: #{tpu_custom_call.1} parent=1 // pred_check
      _
    $region27: #{tpu_custom_call.1} parent=1 // pred_check_branch
      %292 = sbr.rel (0) target = $region29
    $region28: #{tpu_custom_call.1} parent=1 // pred_region
      %293 = dma.done [#allocation3], 256
    $region29: #{tpu_custom_call.1} parent=1 // pred_fallthru
      _
    %294 = vsyncpa [#allocation3], 1

</llo_original>
